<compile_context>
chip_gen: v6e
topology: v6e:2x2x1
jax: 0.10.0
libtpu: 0.0.40
codegen_flags: <defaults>
</compile_context>

<pallas_src>
import jax
import jax.numpy as jnp
from jax.experimental import pallas as pl
from jax.experimental.pallas import tpu as pltpu


_LANE = 128
_VMEM_BUDGET = 40 * 1024 * 1024        # per-step buffers (double-buffered) budget
_VMEM_LIMIT_BYTES = 48 * 1024 * 1024   # scoped-VMEM limit handed to Mosaic (safe on v7x)


def _sublane_multiple(dtype):
    """Packed-sublane granularity: 8 (4-byte), 16 (2-byte), 32 (1-byte)."""
    return {4: 8, 2: 16, 1: 32}.get(jnp.dtype(dtype).itemsize, 8)


def _round_up(x, m):
    return ((x + m - 1) // m) * m


# ---------------------------------------------------------------------------
# Kernels
# ---------------------------------------------------------------------------
def _fc_kernel_acc_out(x_ref, w_ref, b_ref, o_ref):
    """K-reduction GEMM accumulating directly into the resident f32 output block."""
    @pl.when(pl.program_id(2) == 0)
    def _():
        # Fold the bias into the accumulator init (epilogue is then store-only).
        o_ref[...] = jnp.broadcast_to(b_ref[...], o_ref.shape).astype(o_ref.dtype)

    o_ref[...] += jnp.dot(
        x_ref[...], w_ref[...], preferred_element_type=jnp.float32
    )


def _fc_kernel_scratch(x_ref, w_ref, b_ref, o_ref, acc_ref):
    """K-reduction GEMM with an f32 VMEM accumulator (non-f32 outputs)."""
    k = pl.program_id(2)

    @pl.when(k == 0)
    def _():
        acc_ref[...] = jnp.broadcast_to(
            b_ref[...].astype(jnp.float32), acc_ref.shape
        )

    acc_ref[...] += jnp.dot(
        x_ref[...], w_ref[...], preferred_element_type=jnp.float32
    )

    @pl.when(k == pl.num_programs(2) - 1)
    def _():
        o_ref[...] = acc_ref[...].astype(o_ref.dtype)


def _fc_kernel_single_k(x_ref, w_ref, b_ref, o_ref):
    """Whole reduction fits in one K tile: no accumulator needed."""
    acc = jnp.dot(x_ref[...], w_ref[...], preferred_element_type=jnp.float32)
    o_ref[...] = (acc + b_ref[...].astype(jnp.float32)).astype(o_ref.dtype)


# ---------------------------------------------------------------------------
# Tile selection helpers
# ---------------------------------------------------------------------------
def _choose_tile_and_pad(dim, preferred, multiple):
    """Pick a tile (multiple of `multiple`, <= preferred) and the padded dim it
    divides.  Prefers an existing divisor of the aligned dim; otherwise pads the
    dim up to a tile multiple so no single tile exceeds `preferred`."""
    pref = max(multiple, (preferred // multiple) * multiple)
    dim_p = _round_up(dim, multiple)
    if dim_p <= pref:
        return dim_p, dim_p
    t = pref
    lo = max(multiple, pref // 2)
    while t >= lo:
        if dim_p % t == 0:
            return t, dim_p
        t -= multiple
    return pref, _round_up(dim_p, pref)


def _split_for_megacore(tile, dim_p, multiple):
    """Largest tile <= tile//2 (multiple-aligned) dividing dim_p, else tile."""
    start = (tile // 2) // multiple * multiple
    for cand in range(start, multiple - 1, -multiple):
        if dim_p % cand == 0:
            return cand
    return tile


# ---------------------------------------------------------------------------
# Wrapper
# ---------------------------------------------------------------------------
def fc_forward(x, w, b, *, tm=512, tn=512, tk=1024, interpret=False):
    """Fully connected forward pass: x @ w + b via a Pallas TPU kernel.

    Args:
        x: (batch_size, num_input)
        w: (num_input, num_output)
        b: (1, num_output)
    Returns:
        (batch_size, num_output), dtype = promote_types(x.dtype, w.dtype)
    """
    M, K = x.shape
    K2, N = w.shape
    assert K == K2, f"shape mismatch: x{x.shape} vs w{w.shape}"
    assert b.shape == (1, N), f"bias must be (1, {N}), got {b.shape}"

    x_bytes = jnp.dtype(x.dtype).itemsize
    w_bytes = jnp.dtype(w.dtype).itemsize
    b_bytes = jnp.dtype(b.dtype).itemsize
    out_dtype = jnp.promote_types(x.dtype, w.dtype)
    out_bytes = jnp.dtype(out_dtype).itemsize
    sub_m = _sublane_multiple(x.dtype)

    # Narrow dtypes: double the lane-dims for 2x arithmetic intensity at equal VMEM.
    if max(x_bytes, w_bytes) <= 2:
        tn *= 2
        tk *= 2

    # Shrink *preferred* tiles until double-buffered per-step VMEM fits budget
    # (worst case includes an f32 scratch accumulator).
    def vmem_bytes(tm_, tn_, tk_):
        buf = 2 * (tm_ * tk_ * x_bytes + tk_ * tn_ * w_bytes + tn_ * b_bytes)
        buf += 2 * tm_ * tn_ * out_bytes
        buf += tm_ * tn_ * 4
        return buf

    while vmem_bytes(tm, tn, tk) > _VMEM_BUDGET:
        if tk > 2 * _LANE:
            tk //= 2
        elif tn > 2 * _LANE:
            tn //= 2
        elif tm > 2 * sub_m:
            tm //= 2
        else:
            break

    tm, Mp = _choose_tile_and_pad(M, tm, sub_m)
    tn, Np = _choose_tile_and_pad(N, tn, _LANE)
    tk, Kp = _choose_tile_and_pad(K, tk, _LANE)

    # v7x megacore: try to guarantee >= 2 parallel (i, j) grid steps.
    if (Mp // tm) * (Np // tn) < 2:
        tn = _split_for_megacore(tn, Np, _LANE)
    if (Mp // tm) * (Np // tn) < 2:
        tm = _split_for_megacore(tm, Mp, sub_m)

    # Zero-pad inputs so every dim is an exact tile multiple (keeps tiles
    # bounded and output stores lane-dense / unmasked). Zeros do not change the
    # matmul result; padded output rows/cols are sliced off at the end.
    xp = x if (Mp == M and Kp == K) else jnp.pad(x, ((0, Mp - M), (0, Kp - K)))
    wp = w if (Kp == K and Np == N) else jnp.pad(w, ((0, Kp - K), (0, Np - N)))
    bp = b if Np == N else jnp.pad(b, ((0, 0), (0, Np - N)))

    nk = Kp // tk
    grid = (Mp // tm, Np // tn, nk)

    if nk == 1:
        kernel = _fc_kernel_single_k
        scratch_shapes = []
    elif out_dtype == jnp.float32:
        kernel = _fc_kernel_acc_out
        scratch_shapes = []
    else:
        kernel = _fc_kernel_scratch
        scratch_shapes = [pltpu.VMEM((tm, tn), jnp.float32)]

    # Advisory cost estimate with the real tiled (re-read) HBM traffic.
    cost = pl.CostEstimate(
        flops=2 * Mp * Np * Kp,
        transcendentals=0,
        bytes_accessed=(
            Mp * Kp * (Np // tn) * x_bytes
            + Kp * Np * (Mp // tm) * w_bytes
            + Np * b_bytes
            + Mp * Np * out_bytes
        ),
    )

    out = pl.pallas_call(
        kernel,
        out_shape=jax.ShapeDtypeStruct((Mp, Np), out_dtype),
        grid_spec=pltpu.PrefetchScalarGridSpec(
            num_scalar_prefetch=0,
            grid=grid,
            in_specs=[
                pl.BlockSpec((tm, tk), lambda i, j, k: (i, k)),   # X tile
                pl.BlockSpec((tk, tn), lambda i, j, k: (k, j)),   # W tile
                pl.BlockSpec((1, tn), lambda i, j, k: (0, j)),    # bias tile
            ],
            out_specs=pl.BlockSpec((tm, tn), lambda i, j, k: (i, j)),
            scratch_shapes=scratch_shapes,
        ),
        compiler_params=pltpu.CompilerParams(
            dimension_semantics=("parallel", "parallel", "arbitrary"),
            vmem_limit_bytes=_VMEM_LIMIT_BYTES,
        ),
        cost_estimate=cost,
        interpret=interpret,
    )(xp, wp, bp)

    if (Mp, Np) != (M, N):
        out = out[:M, :N]
    return out


if __name__ == "__main__":
    key = jax.random.PRNGKey(0)
    kx, kw, k2x, k2w = jax.random.split(key, 4)

    # Small shapes consistent with the module: batch=8, num_input=32, num_output=128.
    batch_size, num_input, num_output = 8, 32, 128
    x = jax.random.normal(kx, (batch_size, num_input), dtype=jnp.float32)
    # Same init scheme as the PyTorch module: randn * sqrt(2 / (in + out)).
    w = jax.random.normal(kw, (num_input, num_output), dtype=jnp.float32) * (
        2.0 / (num_input + num_output)
    ) ** 0.5
    b = jnp.zeros((1, num_output), dtype=jnp.float32)

    y = fc_forward(x, w, b)
    jax.block_until_ready(y)
    y_ref = x @ w + b
    assert y.shape == (batch_size, num_output)
    assert jnp.allclose(y, y_ref, atol=1e-4, rtol=1e-4), float(
        jnp.max(jnp.abs(y - y_ref))
    )

    # Exercise the multi-tile / K-reduction (accumulate-into-output) path.
    M2, K2d, N2 = 64, 384, 256
    x2 = jax.random.normal(k2x, (M2, K2d), dtype=jnp.float32)
    w2 = jax.random.normal(k2w, (K2d, N2), dtype=jnp.float32) * (
        2.0 / (K2d + N2)
    ) ** 0.5
    b2 = jnp.full((1, N2), 0.5, dtype=jnp.float32)
    y2 = fc_forward(x2, w2, b2, tm=32, tn=128, tk=128)
    jax.block_until_ready(y2)
    assert jnp.allclose(y2, x2 @ w2 + b2, atol=1e-4, rtol=1e-4)

    # Exercise the bf16 path (f32 VMEM accumulator, bf16 output).
    y3 = fc_forward(
        x2.astype(jnp.bfloat16), w2.astype(jnp.bfloat16), b2.astype(jnp.bfloat16),
        tm=32, tn=128, tk=128,
    )
    jax.block_until_ready(y3)
    assert jnp.allclose(
        y3.astype(jnp.float32), x2 @ w2 + b2, atol=5e-2, rtol=5e-2
    )

    print("KERNEL_OK")
</pallas_src>

<mosaic_0001>
module attributes {stable_mosaic.version = 11 : i64} {
  func.func @_fc_kernel_single_k(%arg0: i32, %arg1: i32, %arg2: i32, %arg3: memref<8x128xf32, #tpu.memory_space<vmem>>, %arg4: memref<128x128xf32, #tpu.memory_space<vmem>>, %arg5: memref<1x128xf32, #tpu.memory_space<vmem>>, %arg6: memref<8x128xf32, #tpu.memory_space<vmem>>) attributes {dimension_semantics = [#tpu.dimension_semantics<parallel>, #tpu.dimension_semantics<parallel>, #tpu.dimension_semantics<arbitrary>], iteration_bounds = array<i64: 1, 1, 1>, scalar_prefetch = 0 : i64, scratch_operands = 0 : i64, tpu.core_type = #tpu.core_type<tc>, window_params = [{transform_indices = @transform_0, window_bounds = array<i64: 8, 128>}, {transform_indices = @transform_1, window_bounds = array<i64: 128, 128>}, {transform_indices = @transform_2, window_bounds = array<i64: 1, 128>}, {transform_indices = @transform_3, window_bounds = array<i64: 8, 128>}]} {
    %c0 = arith.constant 0 : index
    %c0_0 = arith.constant 0 : index
    %0 = vector.load %arg3[%c0, %c0_0] : memref<8x128xf32, #tpu.memory_space<vmem>>, vector<8x128xf32>
    %c0_1 = arith.constant 0 : index
    %c0_2 = arith.constant 0 : index
    %1 = vector.load %arg4[%c0_1, %c0_2] : memref<128x128xf32, #tpu.memory_space<vmem>>, vector<128x128xf32>
    %cst = arith.constant dense<0.000000e+00> : vector<8x128xf32>
    %2 = tpu.matmul %0, %1, %cst {dimension_numbers = #tpu.dot_dimension_numbers<[1], [0], [0], [1], [0, 0, 1, 1], [], []>} : vector<8x128xf32>, vector<128x128xf32>, vector<8x128xf32> -> vector<8x128xf32>
    %c0_3 = arith.constant 0 : index
    %c0_4 = arith.constant 0 : index
    %3 = vector.load %arg5[%c0_3, %c0_4] : memref<1x128xf32, #tpu.memory_space<vmem>>, vector<1x128xf32>
    %4 = vector.broadcast %3 : vector<1x128xf32> to vector<8x128xf32>
    %5 = arith.addf %2, %4 : vector<8x128xf32>
    %c0_5 = arith.constant 0 : index
    %c0_6 = arith.constant 0 : index
    %6 = vector.load %arg6[%c0_5, %c0_6] : memref<8x128xf32, #tpu.memory_space<vmem>>, vector<8x128xf32>
    tpu.vector_store %arg6[%c0_5, %c0_6], %5 {strides = array<i32>} : memref<8x128xf32, #tpu.memory_space<vmem>>, vector<8x128xf32>,
    return
  }
  func.func @transform_0(%arg0: i32, %arg1: i32, %arg2: i32) -> (i32, i32) {
    %c0_i32 = arith.constant 0 : i32
    return %arg0, %arg2 : i32, i32
  }
  func.func @transform_1(%arg0: i32, %arg1: i32, %arg2: i32) -> (i32, i32) {
    %c0_i32 = arith.constant 0 : i32
    return %arg2, %arg1 : i32, i32
  }
  func.func @transform_2(%arg0: i32, %arg1: i32, %arg2: i32) -> (i32, i32) {
    %c0_i32 = arith.constant 0 : i32
    %c0_i32_0 = arith.constant 0 : i32
    return %c0_i32, %arg1 : i32, i32
  }
  func.func @transform_3(%arg0: i32, %arg1: i32, %arg2: i32) -> (i32, i32) {
    %c0_i32 = arith.constant 0 : i32
    return %arg0, %arg1 : i32, i32
  }
}

</mosaic_0001>

<llo_original>
// kernel: tpu_custom_call.1
$region0: #{tpu_custom_call.1}
  #allocation0 [shape = 'u32[]', space=smem, size = 0x4, offset = 0x4, fixed_abs, tag = 'smem constant byte address 0x4 - core index']
  #allocation1 [shape = 'u32[144,128]{1,0:T(1,128)}', space=vmem, size = 0x12000, scoped, tag = 'internal scratch']
  %s0 = inlined_call_operand.hbm [shape: f32[8,128], index: 0, kind: input, shape index: {}]
  %s1 = inlined_call_operand.hbm [shape: f32[128,128], index: 1, kind: input, shape index: {}]
  %s2 = inlined_call_operand.vmem [shape: f32[1,128], index: 2, kind: input, shape index: {}]
  %s3 = inlined_call_operand.hbm [shape: f32[8,128], index: 3, kind: output, shape index: {}]
  %s4 = sld [smem:[#allocation0]]
  $region30: #{tpu_custom_call.1} parent=0
    _
  %s6 = ssub.s32 1, %s4
  %s7 = scalar_select 0, %s6, %s4
  $region1: #{tpu_custom_call.1} parent=0
    #allocation2 [shape = 'u8[4096]{0}', space=vmem, size = 0x1000, scoped, tag = 'input window, operand 0, single buffered']
    #allocation3 [shape = 's32[1]{0}', space=sflag, size = 0x4, scoped, tag = 'scoped memory for tpu_custom_call.1']
    #allocation4 [shape = 's32[1]{0}', space=sflag, size = 0x4, scoped, tag = 'scoped memory for tpu_custom_call.1']
    #allocation5 [shape = 'u8[65536]{0}', space=vmem, size = 0x10000, scoped, tag = 'input window, operand 1, single buffered']
    #allocation6 [shape = 's32[1]{0}', space=sflag, size = 0x4, scoped, tag = 'scoped memory for tpu_custom_call.1']
    #allocation7 [shape = 'u8[4096]{0}', space=vmem, size = 0x1000, scoped, tag = 'output window, operand 0, single buffered']
    %8 = vsyncpa [#allocation3], 0
    %9 = vsyncpa [#allocation6], 0
    %10 = vsyncpa [#allocation4], 0
    // Predicated region
    $region2: #{tpu_custom_call.1} parent=1 // pred_check
      _
    $region3: #{tpu_custom_call.1} parent=1 // pred_check_branch
      %12 = sbr.rel (0) target = $region5
    $region4: #{tpu_custom_call.1} parent=1 // pred_region
      %s14 = ssub.s32 128, 128
      %15 = vsyncadd [#allocation3], %s14
      %s17 = sshll.u32 [#allocation2], 4
      %s18 = int_to_ptr.vmem [resolvable:$true] %s17
      %20 = dma.hbm_to_vmem [thread:$0]  %s0, 128, %s18, [#allocation3]
    $region5: #{tpu_custom_call.1} parent=1 // pred_fallthru
      _
    // Predicated region
    $region6: #{tpu_custom_call.1} parent=1 // pred_check
      _
    $region7: #{tpu_custom_call.1} parent=1 // pred_check_branch
      %22 = sbr.rel (0) target = $region9
    $region8: #{tpu_custom_call.1} parent=1 // pred_region
      %s24 = ssub.s32 2048, 2048
      %25 = vsyncadd [#allocation6], %s24
      %s26 = sshll.u32 [#allocation5], 4
      %s27 = int_to_ptr.vmem [resolvable:$true] %s26
      %32 = dma.hbm_to_vmem [thread:$0]  %s1, 2048, %s27, [#allocation6], 128, 128, 8
    $region9: #{tpu_custom_call.1} parent=1 // pred_fallthru
      _
    // Predicated region
    $region10: #{tpu_custom_call.1} parent=1 // pred_check
      _
    $region11: #{tpu_custom_call.1} parent=1 // pred_check_branch
      %34 = sbr.rel (0) target = $region13
    $region12: #{tpu_custom_call.1} parent=1 // pred_region
      _
    $region13: #{tpu_custom_call.1} parent=1 // pred_fallthru
      _
    // Predicated region
    $region14: #{tpu_custom_call.1} parent=1 // pred_check
      _
    $region15: #{tpu_custom_call.1} parent=1 // pred_check_branch
      %36 = sbr.rel (0) target = $region17
    $region16: #{tpu_custom_call.1} parent=1 // pred_region
      %37 = dma.done [#allocation3], 128
    $region17: #{tpu_custom_call.1} parent=1 // pred_fallthru
      _
    // Predicated region
    $region18: #{tpu_custom_call.1} parent=1 // pred_check
      _
    $region19: #{tpu_custom_call.1} parent=1 // pred_check_branch
      %39 = sbr.rel (0) target = $region21
    $region20: #{tpu_custom_call.1} parent=1 // pred_region
      %40 = dma.done [#allocation6], 2048
    $region21: #{tpu_custom_call.1} parent=1 // pred_fallthru
      _
    %v41 = vld [vmem:[#allocation2] sm:$0xff]
    %v42 = vld [vmem:[#allocation5] sm:$0xff]
    %v43 = vld [vmem:[#allocation5 + $0x8] sm:$0xff]
    %v44 = vld [vmem:[#allocation5 + $0x10] sm:$0xff]
    %v45 = vld [vmem:[#allocation5 + $0x18] sm:$0xff]
    %v46 = vld [vmem:[#allocation5 + $0x20] sm:$0xff]
    %v47 = vld [vmem:[#allocation5 + $0x28] sm:$0xff]
    %v48 = vld [vmem:[#allocation5 + $0x30] sm:$0xff]
    %v49 = vld [vmem:[#allocation5 + $0x38] sm:$0xff]
    %v50 = vld [vmem:[#allocation5 + $0x40] sm:$0xff]
    %v51 = vld [vmem:[#allocation5 + $0x48] sm:$0xff]
    %v52 = vld [vmem:[#allocation5 + $0x50] sm:$0xff]
    %v53 = vld [vmem:[#allocation5 + $0x58] sm:$0xff]
    %v54 = vld [vmem:[#allocation5 + $0x60] sm:$0xff]
    %v55 = vld [vmem:[#allocation5 + $0x68] sm:$0xff]
    %v56 = vld [vmem:[#allocation5 + $0x70] sm:$0xff]
    %v57 = vld [vmem:[#allocation5 + $0x78] sm:$0xff]
    %v58 = vld [vmem:[%s2] sm:$0x1]
    %v60 = vlaneseq
    %v61 = vshrl.u32 %v60, 7
    %v62 = vsub.s32 0, %v61
    %v63 = vrot.slane %v58, %v62
    %65 = vmatprep.subr.mxu0 0.0
    %66 = vmatpush1.msra.mxu0 %v57
    %67 = vmatprep.subr.mxu0 0.0
    %68 = vmatpush1.msra.mxu0 %v56
    %69 = vmatprep.subr.mxu0 0.0
    %70 = vmatpush1.msra.mxu0 %v55
    %71 = vmatprep.subr.mxu0 0.0
    %72 = vmatpush1.msra.mxu0 %v54
    %73 = vmatprep.subr.mxu0 0.0
    %74 = vmatpush1.msra.mxu0 %v53
    %75 = vmatprep.subr.mxu0 0.0
    %76 = vmatpush1.msra.mxu0 %v52
    %77 = vmatprep.subr.mxu0 0.0
    %78 = vmatpush1.msra.mxu0 %v51
    %79 = vmatprep.subr.mxu0 0.0
    %80 = vmatpush1.msra.mxu0 %v50
    %81 = vmatprep.subr.mxu0 0.0
    %82 = vmatpush1.msra.mxu0 %v49
    %83 = vmatprep.subr.mxu0 0.0
    %84 = vmatpush1.msra.mxu0 %v48
    %85 = vmatprep.subr.mxu0 0.0
    %86 = vmatpush1.msra.mxu0 %v47
    %87 = vmatprep.subr.mxu0 0.0
    %88 = vmatpush1.msra.mxu0 %v46
    %89 = vmatprep.subr.mxu0 0.0
    %90 = vmatpush1.msra.mxu0 %v45
    %91 = vmatprep.subr.mxu0 0.0
    %92 = vmatpush1.msra.mxu0 %v44
    %93 = vmatprep.subr.mxu0 0.0
    %94 = vmatpush1.msra.mxu0 %v43
    %95 = vmatprep.subr.mxu0 0.0
    %96 = vmatpush1.msra.mxu0 %v42
    %97 = vmatprep.subr.mxu0 0.0
    %98 = vmatpush2.msra.mxu0 0.0
    %99 = vmatprep.subr.mxu0 0.0
    %100 = vmatpush2.msra.mxu0 0.0
    %101 = vmatprep.subr.mxu0 0.0
    %102 = vmatpush2.msra.mxu0 0.0
    %103 = vmatprep.subr.mxu0 0.0
    %104 = vmatpush2.msra.mxu0 0.0
    %105 = vmatprep.subr.mxu0 0.0
    %106 = vmatpush2.msra.mxu0 0.0
    %107 = vmatprep.subr.mxu0 0.0
    %108 = vmatpush2.msra.mxu0 0.0
    %109 = vmatprep.subr.mxu0 0.0
    %110 = vmatpush2.msra.mxu0 0.0
    %111 = vmatprep.subr.mxu0 0.0
    %112 = vmatpush2.msra.mxu0 0.0
    %113 = vmatprep.subr.mxu0 0.0
    %114 = vmatpush2.msra.mxu0 0.0
    %115 = vmatprep.subr.mxu0 0.0
    %116 = vmatpush2.msra.mxu0 0.0
    %117 = vmatprep.subr.mxu0 0.0
    %118 = vmatpush2.msra.mxu0 0.0
    %119 = vmatprep.subr.mxu0 0.0
    %120 = vmatpush2.msra.mxu0 0.0
    %121 = vmatprep.subr.mxu0 0.0
    %122 = vmatpush2.msra.mxu0 0.0
    %123 = vmatprep.subr.mxu0 0.0
    %124 = vmatpush2.msra.mxu0 0.0
    %125 = vmatprep.subr.mxu0 0.0
    %126 = vmatpush2.msra.mxu0 0.0
    %127 = vmatprep.subr.mxu0 0.0
    %128 = vmatpush2.msra.mxu0 0.0
    %129 = vmatprep.mubr.f32.mxu0 0.0
    %130 = vmatmul.mubr.f32.gmra.mxu0 %v41
    %v131 = vpop.f32.mrf.mxu0
    %v132 = vadd.f32 %v63, %v131
    %v133 = vpop.f32.mrf.mxu0
    %134 = vdwg.mxu0
    %135 = vst [vmem:[#allocation7] sm:$0xff] %v132
    // Predicated region
    $region22: #{tpu_custom_call.1} parent=1 // pred_check
      _
    $region23: #{tpu_custom_call.1} parent=1 // pred_check_branch
      %137 = sbr.rel (0) target = $region25
    $region24: #{tpu_custom_call.1} parent=1 // pred_region
      %s139 = ssub.s32 128, 128
      %140 = vsyncadd [#allocation4], %s139
      %s142 = sshll.u32 [#allocation7], 4
      %s143 = int_to_ptr.vmem [resolvable:$true] %s142
      %145 = dma.vmem_to_hbm [thread:$0]  %s143, 128, %s3, [#allocation4]
    $region25: #{tpu_custom_call.1} parent=1 // pred_fallthru
      _
    // Predicated region
    $region26: #{tpu_custom_call.1} parent=1 // pred_check
      _
    $region27: #{tpu_custom_call.1} parent=1 // pred_check_branch
      %147 = sbr.rel (0) target = $region29
    $region28: #{tpu_custom_call.1} parent=1 // pred_region
      %148 = dma.done [#allocation4], 128
    $region29: #{tpu_custom_call.1} parent=1 // pred_fallthru
      _
    %149 = vsyncpa [#allocation3], 1
    %150 = vsyncpa [#allocation6], 1
    %151 = vsyncpa [#allocation4], 1

</llo_original>
